<compile_context>
chip_gen: v7x
topology: tpu7x:2x2x1
jax: 0.10.0
libtpu: 0.0.40
codegen_flags: <defaults>
</compile_context>

<pallas_src>
import functools

import jax
import jax.numpy as jnp
from jax import lax
from jax.experimental import pallas as pl
from jax.experimental.pallas import tpu as pltpu

BN_EPS = 1e-5
_LANES = 128


def _conv_row(w_ref, xs, co, c_in):
    """y[co] = sum_ci w[co, ci] * x[ci]  as VPU broadcast FMAs on (S,128) tiles."""
    y = w_ref[co, 0] * xs[0]
    for ci in range(1, c_in):
        y = y + w_ref[co, ci] * xs[ci]
    return y


def _stats_kernel(w_ref, x_ref, sum_ref, sq_ref, min_ref, max_ref,
                  *, c_in, c_out, tile_s, hw, need_mask):
    t = pl.program_id(1)

    @pl.when(t == 0)
    def _init():
        sum_ref[...] = jnp.zeros((c_out, _LANES), jnp.float32)
        sq_ref[...] = jnp.zeros((c_out, _LANES), jnp.float32)
        min_ref[...] = jnp.full((c_out, _LANES), jnp.inf, jnp.float32)
        max_ref[...] = jnp.full((c_out, _LANES), -jnp.inf, jnp.float32)

    # Load each input channel once as a sublane-dense (tile_s, 128) slab.
    xs = [x_ref[ci].astype(jnp.float32) for ci in range(c_in)]

    if need_mask:
        row = lax.broadcasted_iota(jnp.int32, (tile_s, _LANES), 0)
        lane = lax.broadcasted_iota(jnp.int32, (tile_s, _LANES), 1)
        pos = (t * tile_s + row) * _LANES + lane
        valid = pos < hw

    for co in range(c_out):
        y = _conv_row(w_ref, xs, co, c_in)
        if need_mask:
            y_s = jnp.where(valid, y, 0.0)
            y_mn = jnp.where(valid, y, jnp.inf)
            y_mx = jnp.where(valid, y, -jnp.inf)
        else:
            y_s = y_mn = y_mx = y
        r = pl.ds(co, 1)
        sum_ref[r, :] = sum_ref[r, :] + jnp.sum(y_s, axis=0, keepdims=True)
        sq_ref[r, :] = sq_ref[r, :] + jnp.sum(y_s * y_s, axis=0, keepdims=True)
        min_ref[r, :] = jnp.minimum(min_ref[r, :],
                                    jnp.min(y_mn, axis=0, keepdims=True))
        max_ref[r, :] = jnp.maximum(max_ref[r, :],
                                    jnp.max(y_mx, axis=0, keepdims=True))


def _apply_kernel(w_ref, scale_ref, shift_ref, misc_ref, x_ref, o_ref,
                  *, c_in, c_out):
    a = misc_ref[0]         # PReLU slope
    z_min = misc_ref[1]     # global min of post-BN/PReLU activations
    inv_rng = misc_ref[2]   # 1 / (max - min)

    xs = [x_ref[ci].astype(jnp.float32) for ci in range(c_in)]
    for co in range(c_out):
        y = _conv_row(w_ref, xs, co, c_in)
        u = y * scale_ref[co] + shift_ref[co]            # fused BatchNorm
        z = jnp.where(u > 0, u, a * u)                   # PReLU
        o_ref[co] = ((z - z_min) * inv_rng).astype(o_ref.dtype)


def outconv_forward(x_nchw, w_oi, bias, gamma, beta, prelu_a):
    """x_nchw: (N, C_in, H, W); w_oi: (C_out, C_in) 1x1 conv weight.

    `bias` is accepted for interface parity but train-mode BatchNorm cancels
    it exactly (y - mean), so it is intentionally unused.
    """
    del bias
    N, C_in, H, W = x_nchw.shape
    C_out = w_oi.shape[0]
    HW = H * W

    # Keep bf16 activations bf16 in HBM; everything else computes in f32.
    if x_nchw.dtype in (jnp.dtype(jnp.float32), jnp.dtype(jnp.bfloat16)):
        x = x_nchw
    else:
        x = x_nchw.astype(jnp.float32)
    out_dtype = x.dtype
    itemsize = jnp.dtype(out_dtype).itemsize

    s_total = (HW + _LANES - 1) // _LANES
    hw_pad = s_total * _LANES
    if hw_pad == HW:
        # Pure reshape view: no HBM copy, no pad, no trailing slice.
        x4 = x.reshape(N, C_in, s_total, _LANES)
    else:
        # Rare fallback (H*W not a multiple of 128): small pad copy.
        x4 = jnp.pad(x.reshape(N, C_in, HW),
                     ((0, 0), (0, 0), (0, hw_pad - HW))
                     ).reshape(N, C_in, s_total, _LANES)

    # Spatial tile: up to 512 sublane-rows (64K lanes), bounded by a ~8 MiB
    # double-buffered VMEM budget.  tile_s is either a multiple of 8 or the
    # full s_total, satisfying the (8,128) block constraint.
    budget = 8 * 1024 * 1024
    per_row = (C_in + C_out) * itemsize * _LANES * 2          # double-buffered
    cap = max(8, min(512, (budget // per_row) // 8 * 8))
    tile_s = s_total if s_total <= cap else cap
    n_tiles = (s_total + tile_s - 1) // tile_s
    need_mask = (hw_pad != HW) or (s_total % tile_s != 0)

    w = w_oi.astype(jnp.float32)
    smem = pl.BlockSpec(memory_space=pltpu.MemorySpace.SMEM)
    in_block = pl.BlockSpec((None, C_in, tile_s, _LANES),
                            lambda n, t: (n, 0, t, 0))

    # VMEM limit sized from the double-buffered blocks (plenty of headroom;
    # safe on v5e/v6e/v7x).
    vmem_p1 = 2 * C_in * tile_s * _LANES * itemsize + 8 * 4 * C_out * _LANES * 4
    vmem_p2 = 2 * (C_in + C_out) * tile_s * _LANES * itemsize
    vmem_limit = int(min(max(2 * max(vmem_p1, vmem_p2) + (1 << 20), 16 << 20),
                         32 << 20))

    # ---- Pass 1: conv + per-(N, channel) lane-wide sufficient statistics ----
    stat_shape = jax.ShapeDtypeStruct((N, C_out, _LANES), jnp.float32)
    stat_spec = pl.BlockSpec((None, C_out, _LANES), lambda n, t: (n, 0, 0))
    cost1 = pl.CostEstimate(
        flops=int(N * hw_pad * (2 * C_in * C_out + 6 * C_out)),
        transcendentals=0,
        bytes_accessed=int(N * C_in * hw_pad * itemsize
                           + 4 * N * C_out * _LANES * 4))

    sums, sqs, y_min, y_max = pl.pallas_call(
        functools.partial(_stats_kernel, c_in=C_in, c_out=C_out,
                          tile_s=tile_s, hw=HW, need_mask=need_mask),
        out_shape=(stat_shape,) * 4,
        grid=(N, n_tiles),
        in_specs=[smem, in_block],
        out_specs=(stat_spec,) * 4,
        compiler_params=pltpu.CompilerParams(
            dimension_semantics=("parallel", "arbitrary"),
            vmem_limit_bytes=vmem_limit),
        cost_estimate=cost1,
    )(w, x4)

    # ---- Tiny O(C_out) scalar math (plain JAX) ----
    m = jnp.float32(N * HW)
    mean = jnp.sum(sums, axis=(0, 2)) / m
    var = jnp.maximum(jnp.sum(sqs, axis=(0, 2)) / m - mean * mean, 0.0)
    scale = gamma.astype(jnp.float32) * lax.rsqrt(var + BN_EPS)
    shift = beta.astype(jnp.float32) - mean * scale
    y_min_c = jnp.min(y_min, axis=(0, 2))
    y_max_c = jnp.max(y_max, axis=(0, 2))

    # Global range of z = PReLU(scale*y + shift) from per-channel pre-BN
    # extrema: piecewise-linear => extrema at interval endpoints or the PReLU
    # kink (u == 0).  Exact for slope >= 0 (any sign of gamma); for slope < 0
    # the kink term is a tight lower bound of the attained minimum.
    a = prelu_a.reshape(-1)[0].astype(jnp.float32)
    u1 = scale * y_min_c + shift
    u2 = scale * y_max_c + shift
    u_lo = jnp.minimum(u1, u2)
    u_hi = jnp.maximum(u1, u2)
    p_lo = jnp.where(u_lo > 0, u_lo, a * u_lo)
    p_hi = jnp.where(u_hi > 0, u_hi, a * u_hi)
    ch_min = jnp.minimum(p_lo, p_hi)
    ch_min = jnp.where((u_lo <= 0) & (u_hi >= 0),
                       jnp.minimum(ch_min, 0.0), ch_min)
    ch_max = jnp.maximum(p_lo, p_hi)
    z_min = jnp.min(ch_min)
    z_max = jnp.max(ch_max)
    # Guard against constant tensors (max == min) -> avoid NaN/Inf.
    inv_rng = 1.0 / jnp.maximum(z_max - z_min, jnp.float32(1e-12))
    misc = jnp.stack([a, z_min, inv_rng])

    # ---- Pass 2: conv + fused BN + PReLU + min-max normalize ----
    cost2 = pl.CostEstimate(
        flops=int(N * hw_pad * (2 * C_in * C_out + 5 * C_out)),
        transcendentals=0,
        bytes_accessed=int(N * (C_in + C_out) * hw_pad * itemsize))

    out4 = pl.pallas_call(
        functools.partial(_apply_kernel, c_in=C_in, c_out=C_out),
        out_shape=jax.ShapeDtypeStruct((N, C_out, s_total, _LANES), out_dtype),
        grid=(N, n_tiles),
        in_specs=[smem, smem, smem, smem, in_block],
        out_specs=pl.BlockSpec((None, C_out, tile_s, _LANES),
                               lambda n, t: (n, 0, t, 0)),
        compiler_params=pltpu.CompilerParams(
            dimension_semantics=("parallel", "parallel"),
            vmem_limit_bytes=vmem_limit),
        cost_estimate=cost2,
    )(w, scale, shift, misc, x4)

    if hw_pad == HW:
        return out4.reshape(N, C_out, H, W)
    return out4.reshape(N, C_out, hw_pad)[:, :, :HW].reshape(N, C_out, H, W)


def _reference(x, w, b, gamma, beta, a):
    """Pure-JAX reference: Conv1x1 + train-mode BN + PReLU + min-max normalize."""
    y = jnp.einsum('nihw,oi->nohw', x, w) + b[None, :, None, None]
    mean = jnp.mean(y, axis=(0, 2, 3), keepdims=True)
    var = jnp.mean((y - mean) ** 2, axis=(0, 2, 3), keepdims=True)
    z = (y - mean) * lax.rsqrt(var + BN_EPS) * gamma[None, :, None, None] \
        + beta[None, :, None, None]
    z = jnp.where(z > 0, z, a[0] * z)
    return (z - z.min()) / (z.max() - z.min())


if __name__ == "__main__":
    key = jax.random.PRNGKey(0)
    k_x, k_w, k_b, k_g, k_be = jax.random.split(key, 5)

    N, C_in, C_out, H, W = 2, 4, 2, 16, 16

    x = jax.random.normal(k_x, (N, C_in, H, W), dtype=jnp.float32)

    # Parameter init following nn.Conv2d(in,out,1) / BatchNorm2d(out) / PReLU().
    bound = 1.0 / jnp.sqrt(jnp.float32(C_in))
    w = jax.random.uniform(k_w, (C_out, C_in), jnp.float32, -bound, bound)
    b = jax.random.uniform(k_b, (C_out,), jnp.float32, -bound, bound)
    gamma = 1.0 + 0.1 * jax.random.normal(k_g, (C_out,), jnp.float32)
    beta = 0.1 * jax.random.normal(k_be, (C_out,), jnp.float32)
    prelu_a = jnp.array([0.25], dtype=jnp.float32)

    out = outconv_forward(x, w, b, gamma, beta, prelu_a)
    jax.block_until_ready(out)
    assert out.shape == (N, C_out, H, W)

    ref = _reference(x, w, b, gamma, beta, prelu_a)
    err = float(jnp.max(jnp.abs(out - ref)))
    assert err < 1e-4, f"max abs error vs reference: {err}"

    print("KERNEL_OK")
</pallas_src>

<mosaic_0001>
module attributes {stable_mosaic.version = 11 : i64} {
  func.func @_stats_kernel(%arg0: i32, %arg1: i32, %arg2: memref<2x4xf32, #tpu.memory_space<smem>>, %arg3: memref<1x4x2x128xf32, #tpu.memory_space<vmem>>, %arg4: memref<1x2x128xf32, #tpu.memory_space<vmem>>, %arg5: memref<1x2x128xf32, #tpu.memory_space<vmem>>, %arg6: memref<1x2x128xf32, #tpu.memory_space<vmem>>, %arg7: memref<1x2x128xf32, #tpu.memory_space<vmem>>) attributes {dimension_semantics = [#tpu.dimension_semantics<parallel>, #tpu.dimension_semantics<arbitrary>], iteration_bounds = array<i64: 2, 1>, scalar_prefetch = 0 : i64, scratch_operands = 0 : i64, tpu.core_type = #tpu.core_type<tc>, window_params = [{transform_indices = @transform_0, window_bounds = array<i64: 2, 4>}, {transform_indices = @transform_1, window_bounds = array<i64: 1, 4, 2, 128>}, {transform_indices = @transform_2, window_bounds = array<i64: 1, 2, 128>}, {transform_indices = @transform_3, window_bounds = array<i64: 1, 2, 128>}, {transform_indices = @transform_4, window_bounds = array<i64: 1, 2, 128>}, {transform_indices = @transform_5, window_bounds = array<i64: 1, 2, 128>}]} {
    %c0_i32 = arith.constant 0 : i32
    %0 = arith.cmpi eq, %arg1, %c0_i32 : i32
    %1 = arith.extui %0 : i1 to i32
    %c0_i32_0 = arith.constant 0 : i32
    %2 = arith.cmpi ne, %1, %c0_i32_0 : i32
    scf.if %2 {
      %cst_84 = arith.constant 0.000000e+00 : f32
      %107 = vector.broadcast %cst_84 : f32 to vector<2x128xf32>
      %c0_85 = arith.constant 0 : index
      %c0_86 = arith.constant 0 : index
      %c0_87 = arith.constant 0 : index
      %108 = vector.load %arg4[%c0_85, %c0_86, %c0_87] : memref<1x2x128xf32, #tpu.memory_space<vmem>>, vector<1x2x128xf32>
      %109 = vector.shape_cast %108 : vector<1x2x128xf32> to vector<2x128xf32>
      %110 = vector.shape_cast %107 : vector<2x128xf32> to vector<1x2x128xf32>
      tpu.vector_store %arg4[%c0_85, %c0_86, %c0_87], %110 {strides = array<i32>} : memref<1x2x128xf32, #tpu.memory_space<vmem>>, vector<1x2x128xf32>,
      %cst_88 = arith.constant 0.000000e+00 : f32
      %111 = vector.broadcast %cst_88 : f32 to vector<2x128xf32>
      %c0_89 = arith.constant 0 : index
      %c0_90 = arith.constant 0 : index
      %c0_91 = arith.constant 0 : index
      %112 = vector.load %arg5[%c0_89, %c0_90, %c0_91] : memref<1x2x128xf32, #tpu.memory_space<vmem>>, vector<1x2x128xf32>
      %113 = vector.shape_cast %112 : vector<1x2x128xf32> to vector<2x128xf32>
      %114 = vector.shape_cast %111 : vector<2x128xf32> to vector<1x2x128xf32>
      tpu.vector_store %arg5[%c0_89, %c0_90, %c0_91], %114 {strides = array<i32>} : memref<1x2x128xf32, #tpu.memory_space<vmem>>, vector<1x2x128xf32>,
      %cst_92 = arith.constant 0x7F800000 : f32
      %115 = vector.broadcast %cst_92 : f32 to vector<2x128xf32>
      %c0_93 = arith.constant 0 : index
      %c0_94 = arith.constant 0 : index
      %c0_95 = arith.constant 0 : index
      %116 = vector.load %arg6[%c0_93, %c0_94, %c0_95] : memref<1x2x128xf32, #tpu.memory_space<vmem>>, vector<1x2x128xf32>
      %117 = vector.shape_cast %116 : vector<1x2x128xf32> to vector<2x128xf32>
      %118 = vector.shape_cast %115 : vector<2x128xf32> to vector<1x2x128xf32>
      tpu.vector_store %arg6[%c0_93, %c0_94, %c0_95], %118 {strides = array<i32>} : memref<1x2x128xf32, #tpu.memory_space<vmem>>, vector<1x2x128xf32>,
      %cst_96 = arith.constant 0xFF800000 : f32
      %119 = vector.broadcast %cst_96 : f32 to vector<2x128xf32>
      %c0_97 = arith.constant 0 : index
      %c0_98 = arith.constant 0 : index
      %c0_99 = arith.constant 0 : index
      %120 = vector.load %arg7[%c0_97, %c0_98, %c0_99] : memref<1x2x128xf32, #tpu.memory_space<vmem>>, vector<1x2x128xf32>
      %121 = vector.shape_cast %120 : vector<1x2x128xf32> to vector<2x128xf32>
      %122 = vector.shape_cast %119 : vector<2x128xf32> to vector<1x2x128xf32>
      tpu.vector_store %arg7[%c0_97, %c0_98, %c0_99], %122 {strides = array<i32>} : memref<1x2x128xf32, #tpu.memory_space<vmem>>, vector<1x2x128xf32>,
    } else {
    }
    %c0 = arith.constant 0 : index
    %c0_1 = arith.constant 0 : index
    %c0_2 = arith.constant 0 : index
    %c0_3 = arith.constant 0 : index
    %3 = vector.load %arg3[%c0, %c0_1, %c0_2, %c0_3] : memref<1x4x2x128xf32, #tpu.memory_space<vmem>>, vector<1x1x2x128xf32>
    %4 = vector.shape_cast %3 : vector<1x1x2x128xf32> to vector<2x128xf32>
    %c0_4 = arith.constant 0 : index
    %c1 = arith.constant 1 : index
    %c0_5 = arith.constant 0 : index
    %c0_6 = arith.constant 0 : index
    %5 = vector.load %arg3[%c0_4, %c1, %c0_5, %c0_6] : memref<1x4x2x128xf32, #tpu.memory_space<vmem>>, vector<1x1x2x128xf32>
    %6 = vector.shape_cast %5 : vector<1x1x2x128xf32> to vector<2x128xf32>
    %c0_7 = arith.constant 0 : index
    %c2 = arith.constant 2 : index
    %c0_8 = arith.constant 0 : index
    %c0_9 = arith.constant 0 : index
    %7 = vector.load %arg3[%c0_7, %c2, %c0_8, %c0_9] : memref<1x4x2x128xf32, #tpu.memory_space<vmem>>, vector<1x1x2x128xf32>
    %8 = vector.shape_cast %7 : vector<1x1x2x128xf32> to vector<2x128xf32>
    %c0_10 = arith.constant 0 : index
    %c3 = arith.constant 3 : index
    %c0_11 = arith.constant 0 : index
    %c0_12 = arith.constant 0 : index
    %9 = vector.load %arg3[%c0_10, %c3, %c0_11, %c0_12] : memref<1x4x2x128xf32, #tpu.memory_space<vmem>>, vector<1x1x2x128xf32>
    %10 = vector.shape_cast %9 : vector<1x1x2x128xf32> to vector<2x128xf32>
    %c0_13 = arith.constant 0 : index
    %c0_14 = arith.constant 0 : index
    %11 = memref.load %arg2[%c0_13, %c0_14] : memref<2x4xf32, #tpu.memory_space<smem>>
    %12 = vector.broadcast %11 : f32 to vector<2x128xf32>
    %13 = arith.mulf %12, %4 : vector<2x128xf32>
    %c0_15 = arith.constant 0 : index
    %c1_16 = arith.constant 1 : index
    %14 = memref.load %arg2[%c0_15, %c1_16] : memref<2x4xf32, #tpu.memory_space<smem>>
    %15 = vector.broadcast %14 : f32 to vector<2x128xf32>
    %16 = arith.mulf %15, %6 : vector<2x128xf32>
    %17 = arith.addf %13, %16 : vector<2x128xf32>
    %c0_17 = arith.constant 0 : index
    %c2_18 = arith.constant 2 : index
    %18 = memref.load %arg2[%c0_17, %c2_18] : memref<2x4xf32, #tpu.memory_space<smem>>
    %19 = vector.broadcast %18 : f32 to vector<2x128xf32>
    %20 = arith.mulf %19, %8 : vector<2x128xf32>
    %21 = arith.addf %17, %20 : vector<2x128xf32>
    %c0_19 = arith.constant 0 : index
    %c3_20 = arith.constant 3 : index
    %22 = memref.load %arg2[%c0_19, %c3_20] : memref<2x4xf32, #tpu.memory_space<smem>>
    %23 = vector.broadcast %22 : f32 to vector<2x128xf32>
    %24 = arith.mulf %23, %10 : vector<2x128xf32>
    %25 = arith.addf %21, %24 : vector<2x128xf32>
    %c0_21 = arith.constant 0 : index
    %c0_22 = arith.constant 0 : index
    %c0_23 = arith.constant 0 : index
    %26 = vector.load %arg4[%c0_21, %c0_22, %c0_23] : memref<1x2x128xf32, #tpu.memory_space<vmem>>, vector<1x1x128xf32>
    %27 = vector.shape_cast %26 : vector<1x1x128xf32> to vector<1x128xf32>
    %cst = arith.constant dense<0.000000e+00> : vector<128xf32>
    %28 = vector.multi_reduction <add>, %25, %cst [0] : vector<2x128xf32> to vector<128xf32>
    %29 = vector.shape_cast %28 : vector<128xf32> to vector<1x128xf32>
    %30 = arith.addf %27, %29 : vector<1x128xf32>
    %c0_24 = arith.constant 0 : index
    %c0_25 = arith.constant 0 : index
    %c0_26 = arith.constant 0 : index
    %31 = vector.load %arg4[%c0_24, %c0_25, %c0_26] : memref<1x2x128xf32, #tpu.memory_space<vmem>>, vector<1x1x128xf32>
    %32 = vector.shape_cast %31 : vector<1x1x128xf32> to vector<1x128xf32>
    %33 = vector.shape_cast %30 : vector<1x128xf32> to vector<1x1x128xf32>
    tpu.vector_store %arg4[%c0_24, %c0_25, %c0_26], %33 {strides = array<i32>} : memref<1x2x128xf32, #tpu.memory_space<vmem>>, vector<1x1x128xf32>,
    %c0_27 = arith.constant 0 : index
    %c0_28 = arith.constant 0 : index
    %c0_29 = arith.constant 0 : index
    %34 = vector.load %arg5[%c0_27, %c0_28, %c0_29] : memref<1x2x128xf32, #tpu.memory_space<vmem>>, vector<1x1x128xf32>
    %35 = vector.shape_cast %34 : vector<1x1x128xf32> to vector<1x128xf32>
    %36 = arith.mulf %25, %25 : vector<2x128xf32>
    %cst_30 = arith.constant dense<0.000000e+00> : vector<128xf32>
    %37 = vector.multi_reduction <add>, %36, %cst_30 [0] : vector<2x128xf32> to vector<128xf32>
    %38 = vector.shape_cast %37 : vector<128xf32> to vector<1x128xf32>
    %39 = arith.addf %35, %38 : vector<1x128xf32>
    %c0_31 = arith.constant 0 : index
    %c0_32 = arith.constant 0 : index
    %c0_33 = arith.constant 0 : index
    %40 = vector.load %arg5[%c0_31, %c0_32, %c0_33] : memref<1x2x128xf32, #tpu.memory_space<vmem>>, vector<1x1x128xf32>
    %41 = vector.shape_cast %40 : vector<1x1x128xf32> to vector<1x128xf32>
    %42 = vector.shape_cast %39 : vector<1x128xf32> to vector<1x1x128xf32>
    tpu.vector_store %arg5[%c0_31, %c0_32, %c0_33], %42 {strides = array<i32>} : memref<1x2x128xf32, #tpu.memory_space<vmem>>, vector<1x1x128xf32>,
    %c0_34 = arith.constant 0 : index
    %c0_35 = arith.constant 0 : index
    %c0_36 = arith.constant 0 : index
    %43 = vector.load %arg6[%c0_34, %c0_35, %c0_36] : memref<1x2x128xf32, #tpu.memory_space<vmem>>, vector<1x1x128xf32>
    %44 = vector.shape_cast %43 : vector<1x1x128xf32> to vector<1x128xf32>
    %cst_37 = arith.constant dense<0x7F800000> : vector<128xf32>
    %45 = vector.multi_reduction <minimumf>, %25, %cst_37 [0] : vector<2x128xf32> to vector<128xf32>
    %46 = vector.shape_cast %45 : vector<128xf32> to vector<1x128xf32>
    %47 = arith.minimumf %44, %46 : vector<1x128xf32>
    %c0_38 = arith.constant 0 : index
    %c0_39 = arith.constant 0 : index
    %c0_40 = arith.constant 0 : index
    %48 = vector.load %arg6[%c0_38, %c0_39, %c0_40] : memref<1x2x128xf32, #tpu.memory_space<vmem>>, vector<1x1x128xf32>
    %49 = vector.shape_cast %48 : vector<1x1x128xf32> to vector<1x128xf32>
    %50 = vector.shape_cast %47 : vector<1x128xf32> to vector<1x1x128xf32>
    tpu.vector_store %arg6[%c0_38, %c0_39, %c0_40], %50 {strides = array<i32>} : memref<1x2x128xf32, #tpu.memory_space<vmem>>, vector<1x1x128xf32>,
    %c0_41 = arith.constant 0 : index
    %c0_42 = arith.constant 0 : index
    %c0_43 = arith.constant 0 : index
    %51 = vector.load %arg7[%c0_41, %c0_42, %c0_43] : memref<1x2x128xf32, #tpu.memory_space<vmem>>, vector<1x1x128xf32>
    %52 = vector.shape_cast %51 : vector<1x1x128xf32> to vector<1x128xf32>
    %cst_44 = arith.constant dense<0xFF800000> : vector<128xf32>
    %53 = vector.multi_reduction <maximumf>, %25, %cst_44 [0] : vector<2x128xf32> to vector<128xf32>
    %54 = vector.shape_cast %53 : vector<128xf32> to vector<1x128xf32>
    %55 = arith.maximumf %52, %54 : vector<1x128xf32>
    %c0_45 = arith.constant 0 : index
    %c0_46 = arith.constant 0 : index
    %c0_47 = arith.constant 0 : index
    %56 = vector.load %arg7[%c0_45, %c0_46, %c0_47] : memref<1x2x128xf32, #tpu.memory_space<vmem>>, vector<1x1x128xf32>
    %57 = vector.shape_cast %56 : vector<1x1x128xf32> to vector<1x128xf32>
    %58 = vector.shape_cast %55 : vector<1x128xf32> to vector<1x1x128xf32>
    tpu.vector_store %arg7[%c0_45, %c0_46, %c0_47], %58 {strides = array<i32>} : memref<1x2x128xf32, #tpu.memory_space<vmem>>, vector<1x1x128xf32>,
    %c1_48 = arith.constant 1 : index
    %c0_49 = arith.constant 0 : index
    %59 = memref.load %arg2[%c1_48, %c0_49] : memref<2x4xf32, #tpu.memory_space<smem>>
    %60 = vector.broadcast %59 : f32 to vector<2x128xf32>
    %61 = arith.mulf %60, %4 : vector<2x128xf32>
    %c1_50 = arith.constant 1 : index
    %c1_51 = arith.constant 1 : index
    %62 = memref.load %arg2[%c1_50, %c1_51] : memref<2x4xf32, #tpu.memory_space<smem>>
    %63 = vector.broadcast %62 : f32 to vector<2x128xf32>
    %64 = arith.mulf %63, %6 : vector<2x128xf32>
    %65 = arith.addf %61, %64 : vector<2x128xf32>
    %c1_52 = arith.constant 1 : index
    %c2_53 = arith.constant 2 : index
    %66 = memref.load %arg2[%c1_52, %c2_53] : memref<2x4xf32, #tpu.memory_space<smem>>
    %67 = vector.broadcast %66 : f32 to vector<2x128xf32>
    %68 = arith.mulf %67, %8 : vector<2x128xf32>
    %69 = arith.addf %65, %68 : vector<2x128xf32>
    %c1_54 = arith.constant 1 : index
    %c3_55 = arith.constant 3 : index
    %70 = memref.load %arg2[%c1_54, %c3_55] : memref<2x4xf32, #tpu.memory_space<smem>>
    %71 = vector.broadcast %70 : f32 to vector<2x128xf32>
    %72 = arith.mulf %71, %10 : vector<2x128xf32>
    %73 = arith.addf %69, %72 : vector<2x128xf32>
    %c0_56 = arith.constant 0 : index
    %c1_57 = arith.constant 1 : index
    %c0_58 = arith.constant 0 : index
    %74 = vector.load %arg4[%c0_56, %c1_57, %c0_58] : memref<1x2x128xf32, #tpu.memory_space<vmem>>, vector<1x1x128xf32>
    %75 = vector.shape_cast %74 : vector<1x1x128xf32> to vector<1x128xf32>
    %cst_59 = arith.constant dense<0.000000e+00> : vector<128xf32>
    %76 = vector.multi_reduction <add>, %73, %cst_59 [0] : vector<2x128xf32> to vector<128xf32>
    %77 = vector.shape_cast %76 : vector<128xf32> to vector<1x128xf32>
    %78 = arith.addf %75, %77 : vector<1x128xf32>
    %c0_60 = arith.constant 0 : index
    %c1_61 = arith.constant 1 : index
    %c0_62 = arith.constant 0 : index
    %79 = vector.load %arg4[%c0_60, %c1_61, %c0_62] : memref<1x2x128xf32, #tpu.memory_space<vmem>>, vector<1x1x128xf32>
    %80 = vector.shape_cast %79 : vector<1x1x128xf32> to vector<1x128xf32>
    %81 = vector.shape_cast %78 : vector<1x128xf32> to vector<1x1x128xf32>
    tpu.vector_store %arg4[%c0_60, %c1_61, %c0_62], %81 {strides = array<i32>} : memref<1x2x128xf32, #tpu.memory_space<vmem>>, vector<1x1x128xf32>,
    %c0_63 = arith.constant 0 : index
    %c1_64 = arith.constant 1 : index
    %c0_65 = arith.constant 0 : index
    %82 = vector.load %arg5[%c0_63, %c1_64, %c0_65] : memref<1x2x128xf32, #tpu.memory_space<vmem>>, vector<1x1x128xf32>
    %83 = vector.shape_cast %82 : vector<1x1x128xf32> to vector<1x128xf32>
    %84 = arith.mulf %73, %73 : vector<2x128xf32>
    %cst_66 = arith.constant dense<0.000000e+00> : vector<128xf32>
    %85 = vector.multi_reduction <add>, %84, %cst_66 [0] : vector<2x128xf32> to vector<128xf32>
    %86 = vector.shape_cast %85 : vector<128xf32> to vector<1x128xf32>
    %87 = arith.addf %83, %86 : vector<1x128xf32>
    %c0_67 = arith.constant 0 : index
    %c1_68 = arith.constant 1 : index
    %c0_69 = arith.constant 0 : index
    %88 = vector.load %arg5[%c0_67, %c1_68, %c0_69] : memref<1x2x128xf32, #tpu.memory_space<vmem>>, vector<1x1x128xf32>
    %89 = vector.shape_cast %88 : vector<1x1x128xf32> to vector<1x128xf32>
    %90 = vector.shape_cast %87 : vector<1x128xf32> to vector<1x1x128xf32>
    tpu.vector_store %arg5[%c0_67, %c1_68, %c0_69], %90 {strides = array<i32>} : memref<1x2x128xf32, #tpu.memory_space<vmem>>, vector<1x1x128xf32>,
    %c0_70 = arith.constant 0 : index
    %c1_71 = arith.constant 1 : index
    %c0_72 = arith.constant 0 : index
    %91 = vector.load %arg6[%c0_70, %c1_71, %c0_72] : memref<1x2x128xf32, #tpu.memory_space<vmem>>, vector<1x1x128xf32>
    %92 = vector.shape_cast %91 : vector<1x1x128xf32> to vector<1x128xf32>
    %cst_73 = arith.constant dense<0x7F800000> : vector<128xf32>
    %93 = vector.multi_reduction <minimumf>, %73, %cst_73 [0] : vector<2x128xf32> to vector<128xf32>
    %94 = vector.shape_cast %93 : vector<128xf32> to vector<1x128xf32>
    %95 = arith.minimumf %92, %94 : vector<1x128xf32>
    %c0_74 = arith.constant 0 : index
    %c1_75 = arith.constant 1 : index
    %c0_76 = arith.constant 0 : index
    %96 = vector.load %arg6[%c0_74, %c1_75, %c0_76] : memref<1x2x128xf32, #tpu.memory_space<vmem>>, vector<1x1x128xf32>
    %97 = vector.shape_cast %96 : vector<1x1x128xf32> to vector<1x128xf32>
    %98 = vector.shape_cast %95 : vector<1x128xf32> to vector<1x1x128xf32>
    tpu.vector_store %arg6[%c0_74, %c1_75, %c0_76], %98 {strides = array<i32>} : memref<1x2x128xf32, #tpu.memory_space<vmem>>, vector<1x1x128xf32>,
    %c0_77 = arith.constant 0 : index
    %c1_78 = arith.constant 1 : index
    %c0_79 = arith.constant 0 : index
    %99 = vector.load %arg7[%c0_77, %c1_78, %c0_79] : memref<1x2x128xf32, #tpu.memory_space<vmem>>, vector<1x1x128xf32>
    %100 = vector.shape_cast %99 : vector<1x1x128xf32> to vector<1x128xf32>
    %cst_80 = arith.constant dense<0xFF800000> : vector<128xf32>
    %101 = vector.multi_reduction <maximumf>, %73, %cst_80 [0] : vector<2x128xf32> to vector<128xf32>
    %102 = vector.shape_cast %101 : vector<128xf32> to vector<1x128xf32>
    %103 = arith.maximumf %100, %102 : vector<1x128xf32>
    %c0_81 = arith.constant 0 : index
    %c1_82 = arith.constant 1 : index
    %c0_83 = arith.constant 0 : index
    %104 = vector.load %arg7[%c0_81, %c1_82, %c0_83] : memref<1x2x128xf32, #tpu.memory_space<vmem>>, vector<1x1x128xf32>
    %105 = vector.shape_cast %104 : vector<1x1x128xf32> to vector<1x128xf32>
    %106 = vector.shape_cast %103 : vector<1x128xf32> to vector<1x1x128xf32>
    tpu.vector_store %arg7[%c0_81, %c1_82, %c0_83], %106 {strides = array<i32>} : memref<1x2x128xf32, #tpu.memory_space<vmem>>, vector<1x1x128xf32>,
    return
  }
  func.func @transform_0(%arg0: i32, %arg1: i32) -> (i32, i32) {
    %c0_i32 = arith.constant 0 : i32
    %c0_i32_0 = arith.constant 0 : i32
    %c0_i32_1 = arith.constant 0 : i32
    return %c0_i32, %c0_i32_0 : i32, i32
  }
  func.func @transform_1(%arg0: i32, %arg1: i32) -> (i32, i32, i32, i32) {
    %c0_i32 = arith.constant 0 : i32
    %c0_i32_0 = arith.constant 0 : i32
    %c0_i32_1 = arith.constant 0 : i32
    return %arg0, %c0_i32, %arg1, %c0_i32_0 : i32, i32, i32, i32
  }
  func.func @transform_2(%arg0: i32, %arg1: i32) -> (i32, i32, i32) {
    %c0_i32 = arith.constant 0 : i32
    %c0_i32_0 = arith.constant 0 : i32
    %c0_i32_1 = arith.constant 0 : i32
    return %arg0, %c0_i32, %c0_i32_0 : i32, i32, i32
  }
  func.func @transform_3(%arg0: i32, %arg1: i32) -> (i32, i32, i32) {
    %c0_i32 = arith.constant 0 : i32
    %c0_i32_0 = arith.constant 0 : i32
    %c0_i32_1 = arith.constant 0 : i32
    return %arg0, %c0_i32, %c0_i32_0 : i32, i32, i32
  }
  func.func @transform_4(%arg0: i32, %arg1: i32) -> (i32, i32, i32) {
    %c0_i32 = arith.constant 0 : i32
    %c0_i32_0 = arith.constant 0 : i32
    %c0_i32_1 = arith.constant 0 : i32
    return %arg0, %c0_i32, %c0_i32_0 : i32, i32, i32
  }
  func.func @transform_5(%arg0: i32, %arg1: i32) -> (i32, i32, i32) {
    %c0_i32 = arith.constant 0 : i32
    %c0_i32_0 = arith.constant 0 : i32
    %c0_i32_1 = arith.constant 0 : i32
    return %arg0, %c0_i32, %c0_i32_0 : i32, i32, i32
  }
}

</mosaic_0001>

<llo_original>
// kernel: tpu_custom_call.1
$region0: #{tpu_custom_call.1}
  #allocation0 [shape = 'u32[]', space=smem, size = 0x4, offset = 0x4, fixed_abs, tag = 'smem constant byte address 0x4 - core index']
  #allocation1 [shape = 'u32[144,128]{1,0:T(1,128)}', space=vmem, size = 0x12000, scoped, tag = 'internal scratch']
  %s0 = inlined_call_operand.hbm [shape: f32[2,4], index: 0, kind: input, shape index: {}]
  %s1 = inlined_call_operand.hbm [shape: f32[2,4,2,128], index: 1, kind: input, shape index: {}]
  %s2 = inlined_call_operand.hbm [shape: f32[2,2,128], index: 2, kind: output, shape index: {0}]
  %s3 = inlined_call_operand.hbm [shape: f32[2,2,128], index: 3, kind: output, shape index: {1}]
  %s4 = inlined_call_operand.hbm [shape: f32[2,2,128], index: 4, kind: output, shape index: {2}]
  %s5 = inlined_call_operand.hbm [shape: f32[2,2,128], index: 5, kind: output, shape index: {3}]
  %6 = xla_tuple %s2, %s3, %s4, %s5
  %s7 = sld [smem:[#allocation0]]
  $region77: #{tpu_custom_call.1} parent=0
    _
  %s9 = ssub.s32 1, %s7
  %s10 = scalar_select 0, %s9, %s7
  $region1: #{tpu_custom_call.1} parent=0
    #allocation2 [shape = 'u8[1024]{0}', space=smem, size = 0x400, scoped, tag = 'input window, operand 0, single buffered']
    #allocation3 [shape = 's32[2]{0}', space=sflag, size = 0x8, scoped, tag = 'scoped memory for tpu_custom_call.1']
    #allocation4 [shape = 's32[2]{0}', space=sflag, size = 0x8, scoped, tag = 'scoped memory for tpu_custom_call.1']
    #allocation5 [shape = 's32[2]{0}', space=sflag, size = 0x8, scoped, tag = 'scoped memory for tpu_custom_call.1']
    #allocation6 [shape = 'u8[8192]{0}', space=vmem, size = 0x2000, scoped, tag = 'input window, operand 1']
    #allocation7 [shape = 'u8[2048]{0}', space=vmem, size = 0x800, scoped, tag = 'output window, operand 0']
    #allocation8 [shape = 'u8[2048]{0}', space=vmem, size = 0x800, scoped, tag = 'output window, operand 1']
    #allocation9 [shape = 's32[2]{0}', space=sflag, size = 0x8, scoped, tag = 'scoped memory for tpu_custom_call.1']
    #allocation10 [shape = 'u8[2048]{0}', space=vmem, size = 0x800, scoped, tag = 'output window, operand 2']
    #allocation11 [shape = 'u8[2048]{0}', space=vmem, size = 0x800, scoped, tag = 'output window, operand 3']
    #allocation12 [shape = 's32[2]{0}', space=sflag, size = 0x8, scoped, tag = 'scoped memory for tpu_custom_call.1']
    %11 = vsyncpa [#allocation5], 0
    %12 = vsyncpa [#allocation3], 0
    %s13 = scalar_lea.sflag [#allocation3], 1
    %14 = vsyncpa %s13, 0
    %15 = vsyncpa [#allocation4], 0
    %s16 = scalar_lea.sflag [#allocation4], 1
    %17 = vsyncpa %s16, 0
    %18 = vsyncpa [#allocation9], 0
    %s19 = scalar_lea.sflag [#allocation9], 1
    %20 = vsyncpa %s19, 0
    %21 = vsyncpa [#allocation12], 0
    %s22 = scalar_lea.sflag [#allocation12], 1
    %23 = vsyncpa %s22, 0
    loop: start=0, step=1, limit=4
    $region2: #{tpu_custom_call.1} parent=1 // loop_pre_header
      _
    $region3: #{tpu_custom_call.1} parent=1 // loop_header
      %s25 = sphi 0, %s29
      %p26 = scmp.ge.s32.totalorder %s25, 4
      %s32 = sphi 0, %s44
      %s33 = sphi 0, %s40
      %s34 = sphi 0, %s32
      %s35 = sphi 0, %s33
      %s36 = sphi 0, %s34
      %s37 = sphi 0, %s35
      %s45 = sphi 0, %s45
      %s47 = sphi 0, %s45
      %s48 = sphi 0, %s47
      %s62 = sphi 0, %s48
      %s70 = sphi 0, %s72
      %s73 = sphi 0, %s70
      %s74 = sphi 0, %s73
      %s90 = sphi 0, %s74
      %s96 = sphi 0, %s98
      %s99 = sphi 0, %s96
      %s100 = sphi 0, %s99
      %s116 = sphi 0, %s100
      %s122 = sphi 0, %s124
      %s125 = sphi 0, %s122
      %s126 = sphi 0, %s125
      %s142 = sphi 0, %s126
      %s148 = sphi 0, %s150
      %s151 = sphi 0, %s148
      %s152 = sphi 0, %s151
      %s168 = sphi 0, %s152
      %s174 = sphi 0, %s176
      %s177 = sphi 0, %s174
      %s178 = sphi 0, %s177
      %s194 = sphi 0, %s178
    $region4: #{tpu_custom_call.1} parent=1 // loop_header_branch
      %28 = sbr.rel (%p26) target = $region8
    $region5: #{tpu_custom_call.1} parent=1 // loop_body
      %s30 = ssub.s32 %s25, 1
      %s31 = ssub.s32 %s25, 2
      %s38 = sadd.s32 1, %s33
      %p39 = scmp.ge.s32.totalorder %s38, 1
      %s40 = scalar_select %p39, 0, %s38
      %s41 = sadd.s32 1, %s32
      %s42 = scalar_select %p39, %s41, %s32
      %p43 = scmp.ge.s32.totalorder %s42, 2
      %s44 = scalar_select %p43, 0, %s42
      %s46 = sadd.s32 %s45, 1
      %p49 = scmp.eq.s32.totalorder %s25, 1
      %p50 = scmp.ne.s32.totalorder %s45, %s47
      %p51 = scmp.eq.s32.totalorder %s25, 0
      %p52 = por %p50, %p51
      %p53 = scmp.ne.s32.totalorder %s45, %s47
      %p54 = scmp.eq.s32.totalorder %s30, 1
      %p55 = por %p53, %p54
      %p56 = scmp.ne.s32.totalorder %s47, %s48
      %p57 = scmp.eq.s32.totalorder %s30, 0
      %p58 = por %p56, %p57
      %p59 = scmp.ne.s32.totalorder %s47, %s48
      %p60 = scmp.eq.s32.totalorder %s31, 1
      %p61 = por %p59, %p60
      %p63 = scmp.ne.s32.totalorder %s48, %s62
      %p64 = scmp.eq.s32.totalorder %s31, 0
      %p65 = por %p63, %p64
      %s66 = ssub.s32 %s32, %s44
      %s67 = ssub.s32 %s33, %s40
      %s68 = sor.u32 %s66, %s67
      %p69 = scmp.eq.s32.totalorder %s68, 0
      %s71 = sadd.s32 %s70, 1
      %s72 = scalar_select %p69, %s70, %s71
      %p75 = pneg %p69
      %p76 = scmp.eq.s32.totalorder %s25, 1
      %p77 = por %p75, %p76
      %p78 = scmp.ne.s32.totalorder %s70, %s73
      %p79 = scmp.eq.s32.totalorder %s25, 0
      %p80 = por %p78, %p79
      %p81 = scmp.ne.s32.totalorder %s70, %s73
      %p82 = scmp.eq.s32.totalorder %s30, 1
      %p83 = por %p81, %p82
      %p84 = scmp.ne.s32.totalorder %s73, %s74
      %p85 = scmp.eq.s32.totalorder %s30, 0
      %p86 = por %p84, %p85
      %p87 = scmp.ne.s32.totalorder %s73, %s74
      %p88 = scmp.eq.s32.totalorder %s31, 1
      %p89 = por %p87, %p88
      %p91 = scmp.ne.s32.totalorder %s74, %s90
      %p92 = scmp.eq.s32.totalorder %s31, 0
      %p93 = por %p91, %p92
      %s94 = ssub.s32 %s32, %s44
      %p95 = scmp.eq.s32.totalorder %s94, 0
      %s97 = sadd.s32 %s96, 1
      %s98 = scalar_select %p95, %s96, %s97
      %p101 = pneg %p95
      %p102 = scmp.eq.s32.totalorder %s25, 1
      %p103 = por %p101, %p102
      %p104 = scmp.ne.s32.totalorder %s96, %s99
      %p105 = scmp.eq.s32.totalorder %s25, 0
      %p106 = por %p104, %p105
      %p107 = scmp.ne.s32.totalorder %s96, %s99
      %p108 = scmp.eq.s32.totalorder %s30, 1
      %p109 = por %p107, %p108
      %p110 = scmp.ne.s32.totalorder %s99, %s100
      %p111 = scmp.eq.s32.totalorder %s30, 0
      %p112 = por %p110, %p111
      %p113 = scmp.ne.s32.totalorder %s99, %s100
      %p114 = scmp.eq.s32.totalorder %s31, 1
      %p115 = por %p113, %p114
      %p117 = scmp.ne.s32.totalorder %s100, %s116
      %p118 = scmp.eq.s32.totalorder %s31, 0
      %p119 = por %p117, %p118
      %s120 = ssub.s32 %s32, %s44
      %p121 = scmp.eq.s32.totalorder %s120, 0
      %s123 = sadd.s32 %s122, 1
      %s124 = scalar_select %p121, %s122, %s123
      %p127 = pneg %p121
      %p128 = scmp.eq.s32.totalorder %s25, 1
      %p129 = por %p127, %p128
      %p130 = scmp.ne.s32.totalorder %s122, %s125
      %p131 = scmp.eq.s32.totalorder %s25, 0
      %p132 = por %p130, %p131
      %p133 = scmp.ne.s32.totalorder %s122, %s125
      %p134 = scmp.eq.s32.totalorder %s30, 1
      %p135 = por %p133, %p134
      %p136 = scmp.ne.s32.totalorder %s125, %s126
      %p137 = scmp.eq.s32.totalorder %s30, 0
      %p138 = por %p136, %p137
      %p139 = scmp.ne.s32.totalorder %s125, %s126
      %p140 = scmp.eq.s32.totalorder %s31, 1
      %p141 = por %p139, %p140
      %p143 = scmp.ne.s32.totalorder %s126, %s142
      %p144 = scmp.eq.s32.totalorder %s31, 0
      %p145 = por %p143, %p144
      %s146 = ssub.s32 %s32, %s44
      %p147 = scmp.eq.s32.totalorder %s146, 0
      %s149 = sadd.s32 %s148, 1
      %s150 = scalar_select %p147, %s148, %s149
      %p153 = pneg %p147
      %p154 = scmp.eq.s32.totalorder %s25, 1
      %p155 = por %p153, %p154
      %p156 = scmp.ne.s32.totalorder %s148, %s151
      %p157 = scmp.eq.s32.totalorder %s25, 0
      %p158 = por %p156, %p157
      %p159 = scmp.ne.s32.totalorder %s148, %s151
      %p160 = scmp.eq.s32.totalorder %s30, 1
      %p161 = por %p159, %p160
      %p162 = scmp.ne.s32.totalorder %s151, %s152
      %p163 = scmp.eq.s32.totalorder %s30, 0
      %p164 = por %p162, %p163
      %p165 = scmp.ne.s32.totalorder %s151, %s152
      %p166 = scmp.eq.s32.totalorder %s31, 1
      %p167 = por %p165, %p166
      %p169 = scmp.ne.s32.totalorder %s152, %s168
      %p170 = scmp.eq.s32.totalorder %s31, 0
      %p171 = por %p169, %p170
      %s172 = ssub.s32 %s32, %s44
      %p173 = scmp.eq.s32.totalorder %s172, 0
      %s175 = sadd.s32 %s174, 1
      %s176 = scalar_select %p173, %s174, %s175
      %p179 = pneg %p173
      %p180 = scmp.eq.s32.totalorder %s25, 1
      %p181 = por %p179, %p180
      %p182 = scmp.ne.s32.totalorder %s174, %s177
      %p183 = scmp.eq.s32.totalorder %s25, 0
      %p184 = por %p182, %p183
      %p185 = scmp.ne.s32.totalorder %s174, %s177
      %p186 = scmp.eq.s32.totalorder %s30, 1
      %p187 = por %p185, %p186
      %p188 = scmp.ne.s32.totalorder %s177, %s178
      %p189 = scmp.eq.s32.totalorder %s30, 0
      %p190 = por %p188, %p189
      %p191 = scmp.ne.s32.totalorder %s177, %s178
      %p192 = scmp.eq.s32.totalorder %s31, 1
      %p193 = por %p191, %p192
      %p195 = scmp.ne.s32.totalorder %s178, %s194
      %p196 = scmp.eq.s32.totalorder %s31, 0
      %p197 = por %p195, %p196
      %p198 = scmp.le.s32.totalorder 1, %s25
      %p199 = scmp.lt.s32.totalorder %s25, 3
      %p200 = pnand %p198, %p199
      %p201 = pneg %p200
      // Predicated region
      $region9: #{tpu_custom_call.1} parent=5 // pred_check
        _
      $region10: #{tpu_custom_call.1} parent=5 // pred_check_branch
        %203 = sbr.rel (%p200) target = $region12
      $region11: #{tpu_custom_call.1} parent=5 // pred_region
        %s204 = ssub.s32 %s25, 1
        // Predicated region
        $region13: #{tpu_custom_call.1} parent=11 // pred_check
          %p205 = pneg %p58
        $region14: #{tpu_custom_call.1} parent=11 // pred_check_branch
          %207 = sbr.rel (%p205) target = $region16
        $region15: #{tpu_custom_call.1} parent=11 // pred_region
          %s209 = ssub.s32 32, 32
          %210 = vsyncadd [#allocation5], %s209
          %213 = dma.hbm_to_smem %s0, 32, [#allocation2], [#allocation5]
        $region16: #{tpu_custom_call.1} parent=11 // pred_fallthru
          _
      $region12: #{tpu_custom_call.1} parent=5 // pred_fallthru
        _
      %p214 = scmp.lt.s32.totalorder %s25, 2
      // Predicated region
      $region17: #{tpu_custom_call.1} parent=5 // pred_check
        %p215 = pneg %p214
      $region18: #{tpu_custom_call.1} parent=5 // pred_check_branch
        %217 = sbr.rel (%p215) target = $region20
      $region19: #{tpu_custom_call.1} parent=5 // pred_region
        // Predicated region
        $region21: #{tpu_custom_call.1} parent=19 // pred_check
          %p218 = pneg %p80
        $region22: #{tpu_custom_call.1} parent=19 // pred_check_branch
          %220 = sbr.rel (%p218) target = $region24
        $region23: #{tpu_custom_call.1} parent=19 // pred_region
          %s221 = sand.u32 %s70, 1
          %s222 = scalar_lea.sflag [#allocation3], %s221
          %s223 = sand.u32 %s70, 1
          %s224 = smul.addr %s223, 8
          %s225 = scalar_lea.vmem [#allocation6], %s224
          %s227 = ssub.s32 128, 128
          %228 = vsyncadd %s222, %s227
          %s229 = smul.addr %s32, 4
          %s230 = sadd.s32 %s33, %s229
          %s231 = smul.addr %s230, 32
          %s232 = scalar_lea.hbm %s1, %s231
          %s233 = sshll.u32 %s225, 4
          %s234 = int_to_ptr.vmem [resolvable:$true] %s233
          %239 = dma.hbm_to_vmem [thread:$0]  %s232, 128, %s234, %s222, 32, 32, 2
        $region24: #{tpu_custom_call.1} parent=19 // pred_fallthru
          _
      $region20: #{tpu_custom_call.1} parent=5 // pred_fallthru
        _
      %p240 = scmp.le.s32.totalorder 1, %s25
      %p241 = scmp.lt.s32.totalorder %s25, 3
      %p242 = pnand %p240, %p241
      %p243 = pneg %p242
      // Predicated region
      $region25: #{tpu_custom_call.1} parent=5 // pred_check
        _
      $region26: #{tpu_custom_call.1} parent=5 // pred_check_branch
        %245 = sbr.rel (%p242) target = $region28
      $region27: #{tpu_custom_call.1} parent=5 // pred_region
        %s246 = ssub.s32 %s25, 1
        // Predicated region
        $region29: #{tpu_custom_call.1} parent=27 // pred_check
          %p247 = pneg %p58
        $region30: #{tpu_custom_call.1} parent=27 // pred_check_branch
          %249 = sbr.rel (%p247) target = $region32
        $region31: #{tpu_custom_call.1} parent=27 // pred_region
          %250 = dma.done [#allocation5], 32
        $region32: #{tpu_custom_call.1} parent=27 // pred_fallthru
          _
        %s251 = sand.u32 %s73, 1
        %s252 = scalar_lea.sflag [#allocation3], %s251
        %s253 = sand.u32 %s73, 1
        %s254 = smul.addr %s253, 8
        %s255 = scalar_lea.vmem [#allocation6], %s254
        // Predicated region
        $region33: #{tpu_custom_call.1} parent=27 // pred_check
          %p256 = pneg %p86
        $region34: #{tpu_custom_call.1} parent=27 // pred_check_branch
          %258 = sbr.rel (%p256) target = $region36
        $region35: #{tpu_custom_call.1} parent=27 // pred_region
          %259 = dma.done %s252, 128
        $region36: #{tpu_custom_call.1} parent=27 // pred_fallthru
          _
        %260 = sfence
        %p261 = pneg %p58
        %p262 = pneg %p55
        %s263 = sand.u32 %s73, 1
        %s264 = scalar_lea.sflag [#allocation3], %s263
        %s265 = sand.u32 %s73, 1
        %s266 = smul.addr %s265, 8
        %s267 = scalar_lea.vmem [#allocation6], %s266
        %p268 = pneg %p86
        %p269 = pneg %p83
        %p270 = pneg %p112
        %p271 = pneg %p109
        %s272 = sand.u32 %s99, 1
        %s273 = scalar_lea.sflag [#allocation4], %s272
        %s274 = sand.u32 %s99, 1
        %s275 = smul.addr %s274, 2
        %s276 = scalar_lea.vmem [#allocation7], %s275
        %p277 = pneg %p138
        %p278 = pneg %p135
        %s279 = sand.u32 %s30, 1
        %s280 = scalar_lea.sflag [#allocation9], %s279
        %s281 = sand.u32 %s125, 1
        %s282 = smul.addr %s281, 2
        %s283 = scalar_lea.vmem [#allocation8], %s282
        %p284 = pneg %p164
        %p285 = pneg %p161
        %s286 = sand.u32 %s30, 1
        %s287 = scalar_lea.sflag [#allocation9], %s286
        %s288 = sand.u32 %s151, 1
        %s289 = smul.addr %s288, 2
        %s290 = scalar_lea.vmem [#allocation10], %s289
        %p291 = pneg %p190
        %p292 = pneg %p187
        %s293 = sand.u32 %s177, 1
        %s294 = scalar_lea.sflag [#allocation12], %s293
        %s295 = sand.u32 %s177, 1
        %s296 = smul.addr %s295, 2
        %s297 = scalar_lea.vmem [#allocation11], %s296
        %p298 = scmp.eq.s32.totalorder %s35, 0
        // Predicated region
        $region37: #{tpu_custom_call.1} parent=27 // pred_check
          %p299 = pneg %p298
        $region38: #{tpu_custom_call.1} parent=27 // pred_check_branch
          %301 = sbr.rel (%p299) target = $region40
        $region39: #{tpu_custom_call.1} parent=27 // pred_region
          %302 = vst [vmem:[%s276] sm:$0x3] 0.0
          %303 = vst [vmem:[%s283] sm:$0x3] 0.0
          %304 = vst [vmem:[%s290] sm:$0x3] inf
          %305 = vst [vmem:[%s297] sm:$0x3] -inf
        $region40: #{tpu_custom_call.1} parent=27 // pred_fallthru
          _
        %v306 = vld [vmem:[%s255] sm:$0x3]
        %s307 = scalar_lea.vmem %s255, 2 [#allocation6]
        %v308 = vld [vmem:[%s307] sm:$0x3]
        %s309 = scalar_lea.vmem %s255, 4 [#allocation6]
        %v310 = vld [vmem:[%s309] sm:$0x3]
        %s311 = scalar_lea.vmem %s255, 6 [#allocation6]
        %v312 = vld [vmem:[%s311] sm:$0x3]
        %s313 = sld [smem:[#allocation2]]
        %v314 = vstv %s313
        %v315 = vmul.f32 %v314, %v306
        %s316 = sld [smem:[#allocation2 + $0x1]]
        %v317 = vstv %s316
        %v318 = vmul.f32 %v317, %v308
        %v319 = vadd.f32 %v315, %v318
        %s320 = sld [smem:[#allocation2 + $0x2]]
        %v321 = vstv %s320
        %v322 = vmul.f32 %v321, %v310
        %v323 = vadd.f32 %v319, %v322
        %s324 = sld [smem:[#allocation2 + $0x3]]
        %v325 = vstv %s324
        %v326 = vmul.f32 %v325, %v312
        %v327 = vadd.f32 %v323, %v326
        %v328 = vld [vmem:[%s276] sm:$0x1]
        %vm329 = vcmask 1041408
        %v330 = vsel %vm329, %v327, 0.0
        %v331 = vrot.slane %v330, 4
        %v332 = vadd.f32 %v330, %v331
        %v333 = vrot.slane %v332, 2
        %v334 = vadd.f32 %v332, %v333
        %v335 = vrot.slane %v334, 1
        %v336 = vadd.f32 %v334, %v335
        %v337 = vadd.f32 %v328, %v336
        %338 = vst [vmem:[%s276] sm:$0x1] %v337
        %v339 = vld [vmem:[%s283] sm:$0x1]
        %v340 = vmul.f32 %v327, %v327
        %v341 = vsel %vm329, %v340, 0.0
        %v342 = vrot.slane %v341, 4
        %v343 = vadd.f32 %v341, %v342
        %v344 = vrot.slane %v343, 2
        %v345 = vadd.f32 %v343, %v344
        %v346 = vrot.slane %v345, 1
        %v347 = vadd.f32 %v345, %v346
        %v348 = vadd.f32 %v339, %v347
        %349 = vst [vmem:[%s283] sm:$0x1] %v348
        %v350 = vld [vmem:[%s290] sm:$0x1]
        %v351 = vsel %vm329, %v327, inf
        %v352 = vrot.slane %v351, 4
        %v353 = vmin.f32 %v351, %v352
        %v354 = vrot.slane %v353, 2
        %v355 = vmin.f32 %v353, %v354
        %v356 = vrot.slane %v355, 1
        %v357 = vmin.f32 %v355, %v356
        %v358 = vmin.f32 %v350, %v357
        %359 = vst [vmem:[%s290] sm:$0x1] %v358
        %v360 = vld [vmem:[%s297] sm:$0x1]
        %v361 = vsel %vm329, %v327, -inf
        %v362 = vrot.slane %v361, 4
        %v363 = vmax.f32 %v361, %v362
        %v364 = vrot.slane %v363, 2
        %v365 = vmax.f32 %v363, %v364
        %v366 = vrot.slane %v365, 1
        %v367 = vmax.f32 %v365, %v366
        %v368 = vmax.f32 %v360, %v367
        %369 = vst [vmem:[%s297] sm:$0x1] %v368
        %s370 = sld [smem:[#allocation2 + $0x80]]
        %v371 = vstv %s370
        %v372 = vmul.f32 %v371, %v306
        %s373 = sld [smem:[#allocation2 + $0x81]]
        %v374 = vstv %s373
        %v375 = vmul.f32 %v374, %v308
        %v376 = vadd.f32 %v372, %v375
        %s377 = sld [smem:[#allocation2 + $0x82]]
        %v378 = vstv %s377
        %v379 = vmul.f32 %v378, %v310
        %v380 = vadd.f32 %v376, %v379
        %s381 = sld [smem:[#allocation2 + $0x83]]
        %v382 = vstv %s381
        %v383 = vmul.f32 %v382, %v312
        %v384 = vadd.f32 %v380, %v383
        %v385 = vld [vmem:[%s276 + $0x1] sm:$0x1]
        %v386 = vsel %vm329, %v384, 0.0
        %v387 = vrot.slane %v386, 4
        %v388 = vadd.f32 %v386, %v387
        %v389 = vrot.slane %v388, 2
        %v390 = vadd.f32 %v388, %v389
        %v391 = vrot.slane %v390, 1
        %v392 = vadd.f32 %v390, %v391
        %v393 = vadd.f32 %v385, %v392
        %394 = vst [vmem:[%s276 + $0x1] sm:$0x1] %v393
        %v395 = vld [vmem:[%s283 + $0x1] sm:$0x1]
        %v396 = vmul.f32 %v384, %v384
        %v397 = vsel %vm329, %v396, 0.0
        %v398 = vrot.slane %v397, 4
        %v399 = vadd.f32 %v397, %v398
        %v400 = vrot.slane %v399, 2
        %v401 = vadd.f32 %v399, %v400
        %v402 = vrot.slane %v401, 1
        %v403 = vadd.f32 %v401, %v402
        %v404 = vadd.f32 %v395, %v403
        %405 = vst [vmem:[%s283 + $0x1] sm:$0x1] %v404
        %v406 = vld [vmem:[%s290 + $0x1] sm:$0x1]
        %v407 = vsel %vm329, %v384, inf
        %v408 = vrot.slane %v407, 4
        %v409 = vmin.f32 %v407, %v408
        %v410 = vrot.slane %v409, 2
        %v411 = vmin.f32 %v409, %v410
        %v412 = vrot.slane %v411, 1
        %v413 = vmin.f32 %v411, %v412
        %v414 = vmin.f32 %v406, %v413
        %415 = vst [vmem:[%s290 + $0x1] sm:$0x1] %v414
        %v416 = vld [vmem:[%s297 + $0x1] sm:$0x1]
        %v417 = vsel %vm329, %v384, -inf
        %v418 = vrot.slane %v417, 4
        %v419 = vmax.f32 %v417, %v418
        %v420 = vrot.slane %v419, 2
        %v421 = vmax.f32 %v419, %v420
        %v422 = vrot.slane %v421, 1
        %v423 = vmax.f32 %v421, %v422
        %v424 = vmax.f32 %v416, %v423
        %425 = vst [vmem:[%s297 + $0x1] sm:$0x1] %v424
        %s426 = sand.u32 %s99, 1
        %s427 = scalar_lea.sflag [#allocation4], %s426
        %s428 = sand.u32 %s99, 1
        %s429 = smul.addr %s428, 2
        %s430 = scalar_lea.vmem [#allocation7], %s429
        %s431 = sand.u32 %s30, 1
        %s432 = scalar_lea.sflag [#allocation9], %s431
        %s433 = sand.u32 %s125, 1
        %s434 = smul.addr %s433, 2
        %s435 = scalar_lea.vmem [#allocation8], %s434
        %s436 = sand.u32 %s30, 1
        %s437 = scalar_lea.sflag [#allocation9], %s436
        %s438 = sand.u32 %s151, 1
        %s439 = smul.addr %s438, 2
        %s440 = scalar_lea.vmem [#allocation10], %s439
        %s441 = sand.u32 %s177, 1
        %s442 = scalar_lea.sflag [#allocation12], %s441
        %s443 = sand.u32 %s177, 1
        %s444 = smul.addr %s443, 2
        %s445 = scalar_lea.vmem [#allocation11], %s444
        // Predicated region
        $region41: #{tpu_custom_call.1} parent=27 // pred_check
          %p446 = pneg %p109
        $region42: #{tpu_custom_call.1} parent=27 // pred_check_branch
          %448 = sbr.rel (%p446) target = $region44
        $region43: #{tpu_custom_call.1} parent=27 // pred_region
          %s450 = ssub.s32 32, 32
          %451 = vsyncadd %s427, %s450
          %s452 = smul.addr %s34, 32
          %s453 = scalar_lea.hbm %s2, %s452
          %s455 = sshll.u32 %s430, 4
          %s456 = int_to_ptr.vmem [resolvable:$true] %s455
          %458 = dma.vmem_to_hbm [thread:$0]  %s456, 32, %s453, %s427
        $region44: #{tpu_custom_call.1} parent=27 // pred_fallthru
          _
        // Predicated region
        $region45: #{tpu_custom_call.1} parent=27 // pred_check
          %p459 = pneg %p135
        $region46: #{tpu_custom_call.1} parent=27 // pred_check_branch
          %461 = sbr.rel (%p459) target = $region48
        $region47: #{tpu_custom_call.1} parent=27 // pred_region
          %s463 = ssub.s32 32, 32
          %464 = vsyncadd %s432, %s463
          %s465 = smul.addr %s34, 32
          %s466 = scalar_lea.hbm %s3, %s465
          %s468 = sshll.u32 %s435, 4
          %s469 = int_to_ptr.vmem [resolvable:$true] %s468
          %471 = dma.vmem_to_hbm [thread:$0]  %s469, 32, %s466, %s432
        $region48: #{tpu_custom_call.1} parent=27 // pred_fallthru
          _
        // Predicated region
        $region49: #{tpu_custom_call.1} parent=27 // pred_check
          %p472 = pneg %p161
        $region50: #{tpu_custom_call.1} parent=27 // pred_check_branch
          %474 = sbr.rel (%p472) target = $region52
        $region51: #{tpu_custom_call.1} parent=27 // pred_region
          %s476 = ssub.s32 32, 32
          %477 = vsyncadd %s437, %s476
          %s478 = smul.addr %s34, 32
          %s479 = scalar_lea.hbm %s4, %s478
          %s481 = sshll.u32 %s440, 4
          %s482 = int_to_ptr.vmem [resolvable:$true] %s481
          %484 = dma.vmem_to_hbm [thread:$0]  %s482, 32, %s479, %s437
        $region52: #{tpu_custom_call.1} parent=27 // pred_fallthru
          _
        // Predicated region
        $region53: #{tpu_custom_call.1} parent=27 // pred_check
          %p485 = pneg %p187
        $region54: #{tpu_custom_call.1} parent=27 // pred_check_branch
          %487 = sbr.rel (%p485) target = $region56
        $region55: #{tpu_custom_call.1} parent=27 // pred_region
          %s489 = ssub.s32 32, 32
          %490 = vsyncadd %s442, %s489
          %s491 = smul.addr %s34, 32
          %s492 = scalar_lea.hbm %s5, %s491
          %s494 = sshll.u32 %s445, 4
          %s495 = int_to_ptr.vmem [resolvable:$true] %s494
          %497 = dma.vmem_to_hbm [thread:$0]  %s495, 32, %s492, %s442
        $region56: #{tpu_custom_call.1} parent=27 // pred_fallthru
          _
      $region28: #{tpu_custom_call.1} parent=5 // pred_fallthru
        _
      %p498 = scmp.le.s32.totalorder 2, %s25
      // Predicated region
      $region57: #{tpu_custom_call.1} parent=5 // pred_check
        %p499 = pneg %p498
      $region58: #{tpu_custom_call.1} parent=5 // pred_check_branch
        %501 = sbr.rel (%p499) target = $region60
      $region59: #{tpu_custom_call.1} parent=5 // pred_region
        %s502 = ssub.s32 %s25, 2
        // Predicated region
        $region61: #{tpu_custom_call.1} parent=59 // pred_check
          %p503 = pneg %p115
        $region62: #{tpu_custom_call.1} parent=59 // pred_check_branch
          %505 = sbr.rel (%p503) target = $region64
        $region63: #{tpu_custom_call.1} parent=59 // pred_region
          %s506 = sand.u32 %s100, 1
          %s507 = scalar_lea.sflag [#allocation4], %s506
          %s508 = sand.u32 %s100, 1
          %s509 = smul.addr %s508, 2
          %s510 = scalar_lea.vmem [#allocation7], %s509
          %511 = dma.done %s507, 32
        $region64: #{tpu_custom_call.1} parent=59 // pred_fallthru
          _
        // Predicated region
        $region65: #{tpu_custom_call.1} parent=59 // pred_check
          %p512 = pneg %p141
        $region66: #{tpu_custom_call.1} parent=59 // pred_check_branch
          %514 = sbr.rel (%p512) target = $region68
        $region67: #{tpu_custom_call.1} parent=59 // pred_region
          %s515 = sand.u32 %s31, 1
          %s516 = scalar_lea.sflag [#allocation9], %s515
          %s517 = sand.u32 %s126, 1
          %s518 = smul.addr %s517, 2
          %s519 = scalar_lea.vmem [#allocation8], %s518
          %520 = dma.done %s516, 32
        $region68: #{tpu_custom_call.1} parent=59 // pred_fallthru
          _
        // Predicated region
        $region69: #{tpu_custom_call.1} parent=59 // pred_check
          %p521 = pneg %p167
        $region70: #{tpu_custom_call.1} parent=59 // pred_check_branch
          %523 = sbr.rel (%p521) target = $region72
        $region71: #{tpu_custom_call.1} parent=59 // pred_region
          %s524 = sand.u32 %s31, 1
          %s525 = scalar_lea.sflag [#allocation9], %s524
          %s526 = sand.u32 %s152, 1
          %s527 = smul.addr %s526, 2
          %s528 = scalar_lea.vmem [#allocation10], %s527
          %529 = dma.done %s525, 32
        $region72: #{tpu_custom_call.1} parent=59 // pred_fallthru
          _
        // Predicated region
        $region73: #{tpu_custom_call.1} parent=59 // pred_check
          %p530 = pneg %p193
        $region74: #{tpu_custom_call.1} parent=59 // pred_check_branch
          %532 = sbr.rel (%p530) target = $region76
        $region75: #{tpu_custom_call.1} parent=59 // pred_region
          %s533 = sand.u32 %s178, 1
          %s534 = scalar_lea.sflag [#allocation12], %s533
          %s535 = sand.u32 %s178, 1
          %s536 = smul.addr %s535, 2
          %s537 = scalar_lea.vmem [#allocation11], %s536
          %538 = dma.done %s534, 32
        $region76: #{tpu_custom_call.1} parent=59 // pred_fallthru
          _
      $region60: #{tpu_custom_call.1} parent=5 // pred_fallthru
        _
    $region6: #{tpu_custom_call.1} parent=1 // loop_footer
      %s29 = sadd.s32 1, %s25
    $region7: #{tpu_custom_call.1} parent=1 // loop_footer_branch
      %24 = sbr.rel target = $region3
    $region8: #{tpu_custom_call.1} parent=1 // loop_exit
      _
    %539 = vsyncpa [#allocation3], 1
    %s540 = scalar_lea.sflag [#allocation3], 1
    %541 = vsyncpa %s540, 1
    %542 = vsyncpa [#allocation4], 1
    %s543 = scalar_lea.sflag [#allocation4], 1
    %544 = vsyncpa %s543, 1
    %545 = vsyncpa [#allocation9], 1
    %s546 = scalar_lea.sflag [#allocation9], 1
    %547 = vsyncpa %s546, 1
    %548 = vsyncpa [#allocation12], 1
    %s549 = scalar_lea.sflag [#allocation12], 1
    %550 = vsyncpa %s549, 1
    %551 = vsyncpa [#allocation5], 1
    %s552 = scalar_lea.sflag [#allocation5], 1
    %553 = vsyncpa %s552, 1

</llo_original>
